<compile_context>
chip_gen: v7x
topology: tpu7x:2x2x1
jax: 0.10.0
libtpu: 0.0.40
codegen_flags: <defaults>
</compile_context>

<pallas_src>
import functools
import math

import jax
import jax.numpy as jnp
from jax.experimental import pallas as pl
from jax.experimental.pallas import tpu as pltpu


def _round_up(x, m):
    return ((x + m - 1) // m) * m


def _cdiv(a, b):
    return -(-a // b)


def _q_tiling(lq, cap=2048):
    """Lane-dense (multiple-of-128) spatial tile size and tile count."""
    t = _round_up(lq, 128)
    if t <= cap:
        return t, 1
    nt = _cdiv(lq, cap)
    t = _round_up(_cdiv(lq, nt), 128)
    return t, _cdiv(lq, t)


# ----------------------------------------------------------------------------
# Kernel 1: conv as a tap-folded matmul on a flattened, replicate-padded image.
#   grid = (N, T spatial tiles).  Per step:
#     cols (CKp, t_q)  <- KH*KW static lane-shifted windows of the input chunk
#     out  (OCp, t_q)  <- W2 (OCp, CKp) @ cols + bias   [bf16 x bf16 -> f32]
# ----------------------------------------------------------------------------
def _conv_kernel(x_ref, w_ref, b_ref, o_ref, cols_ref, *, offsets, fuse_act,
                 slope):
    # x_ref:    (1, 1, Cp, Lc)   bf16 flattened padded-image chunk (with halo)
    # w_ref:    (OCp, CKp)       bf16 resident weights (CKp = taps * Cp)
    # b_ref:    (OCp, 1)         f32 bias column
    # o_ref:    (1, OCp, t_q)    f32 conv output tile
    # cols_ref: (CKp, t_q)       bf16 scratch -- im2col built in VMEM only
    t_q = o_ref.shape[-1]
    cp = x_ref.shape[2]
    for i, off in enumerate(offsets):            # static unrolled tap loop
        cols_ref[i * cp:(i + 1) * cp, :] = x_ref[0, 0, :, off:off + t_q]
    acc = jnp.dot(w_ref[...], cols_ref[...],
                  preferred_element_type=jnp.float32) + b_ref[...]
    if fuse_act:                                 # norm-off path: fuse LeakyReLU
        acc = jnp.where(acc >= 0, acc, slope * acc)
    o_ref[0] = acc


def _conv_pallas(chunks, w2, b_col, *, t_q, lq_pad, offsets, fuse_act, slope):
    N, T, Cp, Lc = chunks.shape
    OCp, CKp = w2.shape
    kernel = functools.partial(_conv_kernel, offsets=offsets,
                               fuse_act=fuse_act, slope=slope)
    return pl.pallas_call(
        kernel,
        out_shape=jax.ShapeDtypeStruct((N, OCp, lq_pad), jnp.float32),
        grid_spec=pltpu.PrefetchScalarGridSpec(
            num_scalar_prefetch=0,
            grid=(N, T),
            in_specs=[
                pl.BlockSpec((1, 1, Cp, Lc), lambda n, t: (n, t, 0, 0)),
                pl.BlockSpec((OCp, CKp), lambda n, t: (0, 0)),   # resident W
                pl.BlockSpec((OCp, 1), lambda n, t: (0, 0)),     # resident bias
            ],
            out_specs=pl.BlockSpec((1, OCp, t_q), lambda n, t: (n, 0, t)),
            scratch_shapes=[pltpu.VMEM((CKp, t_q), jnp.bfloat16)],
        ),
        compiler_params=pltpu.CompilerParams(
            dimension_semantics=("parallel", "parallel"),
            vmem_limit_bytes=32 * 1024 * 1024),
    )(chunks, w2, b_col)


# ----------------------------------------------------------------------------
# Kernel 2: GroupNorm(num_groups=1) + LeakyReLU(0.02) on the padded
# (N, OCp, HWp) conv output.  Exact two-pass masked statistics; optional
# residual branch res = LeakyReLU(conv).  Outputs stay padded (unmasked vst);
# the wrapper slices/reshapes once at the end.
# ----------------------------------------------------------------------------
def _norm_act_kernel(x_ref, m_ref, g_ref, b_ref, *out_refs, cnt, eps, slope,
                     do_act, with_res):
    x = x_ref[0]                      # (OCp, HWp) f32 conv output (padded)
    m = m_ref[...]                    # validity mask (channels, pixels, stride)
    if with_res:
        out_refs[1][0] = jnp.where(x >= 0, x, slope * x)
    mean = jnp.sum(x * m) / cnt
    d = (x - mean) * m
    var = jnp.sum(d * d) / cnt        # exact two-pass (mean-shifted) variance
    y = (x - mean) * jax.lax.rsqrt(var + eps)
    y = y * g_ref[...] + b_ref[...]   # (OCp,1) affine params broadcast on lanes
    if do_act:
        y = jnp.where(y >= 0, y, slope * y)
    out_refs[0][0] = y


def _norm_act_pallas(q_pad, mask, g_col, b_col, *, cnt, do_act, with_res,
                     eps=1e-5, slope=0.02):
    N, OCp, Lqp = q_pad.shape
    kernel = functools.partial(_norm_act_kernel, cnt=cnt, eps=eps, slope=slope,
                               do_act=do_act, with_res=with_res)
    blk = pl.BlockSpec((1, OCp, Lqp), lambda n: (n, 0, 0))
    if with_res:
        out_shape = (jax.ShapeDtypeStruct((N, OCp, Lqp), jnp.float32),
                     jax.ShapeDtypeStruct((N, OCp, Lqp), jnp.float32))
        out_specs = (blk, blk)
    else:
        out_shape = jax.ShapeDtypeStruct((N, OCp, Lqp), jnp.float32)
        out_specs = blk
    outs = pl.pallas_call(
        kernel,
        out_shape=out_shape,
        grid_spec=pltpu.PrefetchScalarGridSpec(
            num_scalar_prefetch=0,
            grid=(N,),
            in_specs=[
                blk,
                pl.BlockSpec((OCp, Lqp), lambda n: (0, 0)),
                pl.BlockSpec((OCp, 1), lambda n: (0, 0)),
                pl.BlockSpec((OCp, 1), lambda n: (0, 0)),
            ],
            out_specs=out_specs,
        ),
        compiler_params=pltpu.CompilerParams(
            dimension_semantics=("parallel",),
            vmem_limit_bytes=32 * 1024 * 1024),
    )(q_pad, mask, g_col, b_col)
    return tuple(outs) if with_res else (outs,)


# ----------------------------------------------------------------------------
# Module wrapper
# ----------------------------------------------------------------------------
class ConvLayerPallas:
    """Pallas re-implementation of the PyTorch ConvLayer forward pass."""

    def __init__(self, in_channels, out_channels, kernel_size, stride_size,
                 apply_norm=True, apply_activation=True, residual=False,
                 key=None):
        if key is None:
            key = jax.random.PRNGKey(0)
        if isinstance(kernel_size, int):
            kernel_size = (kernel_size, kernel_size)
        self.kernel_size = kernel_size
        self.stride = stride_size
        self.apply_norm = apply_norm
        self.apply_activation = apply_activation
        self.residual = residual
        self.in_channels = in_channels
        self.out_channels = out_channels

        KH, KW = kernel_size
        fan_in = in_channels * KH * KW
        bound = 1.0 / math.sqrt(fan_in)
        k_w, k_b = jax.random.split(key)
        # deterministic synthetic init (kaiming-uniform-like, PyTorch shapes)
        self.weight = jax.random.uniform(
            k_w, (out_channels, in_channels, KH, KW),
            minval=-bound, maxval=bound, dtype=jnp.float32)
        self.bias = jax.random.uniform(
            k_b, (out_channels,), minval=-bound, maxval=bound,
            dtype=jnp.float32)
        # GroupNorm affine params (PyTorch default init)
        self.gn_weight = jnp.ones((out_channels,), jnp.float32)
        self.gn_bias = jnp.zeros((out_channels,), jnp.float32)

        # Layout-ready, padded parameters for the kernels.
        self._cp = _round_up(in_channels, 8)
        self._ocp = _round_up(out_channels, 8)
        n_taps = KH * KW
        # contraction index = tap*Cp + c, with tap = di*KW + dj (matches the
        # in-kernel cols layout).
        w_t = jnp.transpose(self.weight, (0, 2, 3, 1))           # (OC,KH,KW,C)
        w_t = w_t.reshape(out_channels, n_taps, in_channels)
        w_t = jnp.pad(w_t, ((0, self._ocp - out_channels), (0, 0),
                            (0, self._cp - in_channels)))
        self._w2 = w_t.reshape(self._ocp, n_taps * self._cp).astype(jnp.bfloat16)
        self._b_col = jnp.zeros((self._ocp, 1), jnp.float32
                                ).at[:out_channels, 0].set(self.bias)
        self._g_col = jnp.ones((self._ocp, 1), jnp.float32
                               ).at[:out_channels, 0].set(self.gn_weight)
        self._bt_col = jnp.zeros((self._ocp, 1), jnp.float32
                                 ).at[:out_channels, 0].set(self.gn_bias)

    def __call__(self, x_nchw):
        N, C, H, W = x_nchw.shape
        KH, KW = self.kernel_size
        PH, PW = KH // 2, KW // 2
        s = self.stride
        OC = self.out_channels
        Cp, OCp = self._cp, self._ocp

        Hp, Wp = H + 2 * PH, W + 2 * PW
        OH1, OW1 = Hp - KH + 1, Wp - KW + 1          # stride-1 conv extent
        OH = (H + 2 * PH - KH) // s + 1
        OW = (W + 2 * PW - KW) // s + 1

        Lq = OH1 * Wp                                 # flattened stride-1 output
        t_q, T = _q_tiling(Lq)
        Lq_pad = t_q * T
        max_off = (KH - 1) * Wp + (KW - 1)
        Lc = _round_up(t_q + max_off, 128)            # chunk width incl. halo
        Lp = (T - 1) * t_q + Lc
        offsets = tuple(di * Wp + dj for di in range(KH) for dj in range(KW))

        # Only the replicate padding is done in JAX; no im2col materialization.
        xp = jnp.pad(x_nchw.astype(jnp.float32),
                     ((0, 0), (0, 0), (PH, PH), (PW, PW)), mode="edge")
        xp = jnp.pad(xp, ((0, 0), (0, Cp - C), (0, 0), (0, 0)))
        flat = xp.reshape(N, Cp, Hp * Wp).astype(jnp.bfloat16)
        flat = jnp.pad(flat, ((0, 0), (0, 0), (0, Lp - Hp * Wp)))
        # Overlapping q-chunks with a tiny halo so all in-kernel slices are
        # static (halo duplication << the old 9x patches blow-up).
        idx = jnp.arange(T)[:, None] * t_q + jnp.arange(Lc)[None, :]
        chunks = jnp.transpose(flat[:, :, idx], (0, 2, 1, 3))   # (N,T,Cp,Lc)

        fuse_act = self.apply_activation and not self.apply_norm
        q_pad = _conv_pallas(chunks, self._w2, self._b_col,
                             t_q=t_q, lq_pad=Lq_pad, offsets=offsets,
                             fuse_act=fuse_act, slope=0.02)     # (N,OCp,Lq_pad)

        def extract(a):
            y = a[:, :OC, :OH1 * Wp].reshape(N, OC, OH1, Wp)
            return y[:, :, ::s, ::s][:, :, :OH, :OW]

        if not self.apply_norm:
            out = extract(q_pad)          # LeakyReLU (if any) already fused
            return (out, out) if self.residual else out

        # Validity mask over the padded (OCp, Lq_pad) layout: real channels,
        # real output rows/cols, correct stride phase.
        qidx = jnp.arange(Lq_pad)
        col = qidx % Wp
        row = qidx // Wp
        lane_ok = (qidx < OH1 * Wp) & (col < OW1)
        if s > 1:
            lane_ok = lane_ok & (row % s == 0) & (col % s == 0)
        ch_ok = jnp.arange(OCp) < OC
        mask = (ch_ok[:, None] & lane_ok[None, :]).astype(jnp.float32)

        need_res = self.residual and self.apply_activation
        outs = _norm_act_pallas(q_pad, mask, self._g_col, self._bt_col,
                                cnt=float(OC * OH * OW),
                                do_act=self.apply_activation,
                                with_res=need_res)
        out = extract(outs[0])
        if not self.residual:
            return out
        res = extract(outs[1]) if need_res else extract(q_pad)
        return out, res


# ----------------------------------------------------------------------------
# reference (pure JAX) for the sanity check; mirrors the kernel's bf16 operand
# cast (products are exact, only accumulation order differs).
# ----------------------------------------------------------------------------
def _reference(layer, x):
    KH, KW = layer.kernel_size
    PH, PW = KH // 2, KW // 2
    s = layer.stride
    xb = x.astype(jnp.bfloat16).astype(jnp.float32)
    wb = layer.weight.astype(jnp.bfloat16).astype(jnp.float32)
    xp = jnp.pad(xb, ((0, 0), (0, 0), (PH, PH), (PW, PW)), mode="edge")
    conv = jax.lax.conv_general_dilated(
        xp, wb, window_strides=(s, s), padding="VALID",
        dimension_numbers=("NCHW", "OIHW", "NCHW"),
        precision=jax.lax.Precision.HIGHEST)
    conv = conv + layer.bias.reshape(1, -1, 1, 1)
    out = conv
    res = conv
    if layer.apply_norm:
        n = conv.shape[0]
        flat = conv.reshape(n, -1)
        mean = flat.mean(axis=1, keepdims=True)
        var = ((flat - mean) ** 2).mean(axis=1, keepdims=True)
        xn = ((flat - mean) / jnp.sqrt(var + 1e-5)).reshape(conv.shape)
        out = xn * layer.gn_weight.reshape(1, -1, 1, 1) + \
            layer.gn_bias.reshape(1, -1, 1, 1)
    if layer.apply_activation:
        out = jnp.where(out >= 0, out, 0.02 * out)
        res = jnp.where(res >= 0, res, 0.02 * res)
    return out, res


if __name__ == "__main__":
    key = jax.random.PRNGKey(0)
    k_x, k_p = jax.random.split(key)

    N, Cin, H, W = 2, 4, 16, 16
    Cout, K = 8, 3

    x = jax.random.normal(k_x, (N, Cin, H, W), dtype=jnp.float32)

    # All apply_norm / apply_activation combinations (residual=True, stride=1).
    for an, aa in [(True, True), (False, True), (True, False), (False, False)]:
        layer = ConvLayerPallas(Cin, Cout, K, 1, apply_norm=an,
                                apply_activation=aa, residual=True, key=k_p)
        out, res = layer(x)
        out = jax.block_until_ready(out)
        res = jax.block_until_ready(res)
        out_ref, res_ref = _reference(layer, x)
        assert out.shape == (N, Cout, H, W) and res.shape == (N, Cout, H, W)
        assert jnp.allclose(out, out_ref, atol=2e-4, rtol=2e-4), \
            f"out mismatch (norm={an}, act={aa})"
        assert jnp.allclose(res, res_ref, atol=2e-4, rtol=2e-4), \
            f"res mismatch (norm={an}, act={aa})"

    # residual=False, stride=2 path (single output, strided conv).
    layer = ConvLayerPallas(Cin, Cout, K, 2, apply_norm=True,
                            apply_activation=True, residual=False, key=k_p)
    out = jax.block_until_ready(layer(x))
    out_ref, _ = _reference(layer, x)
    assert out.shape == out_ref.shape
    assert jnp.allclose(out, out_ref, atol=2e-4, rtol=2e-4), "stride-2 mismatch"

    print("KERNEL_OK")
</pallas_src>

<mosaic_0001>
module attributes {stable_mosaic.version = 11 : i64} {
  func.func @_conv_kernel(%arg0: i32, %arg1: i32, %arg2: memref<1x1x8x512xbf16, #tpu.memory_space<vmem>>, %arg3: memref<8x72xbf16, #tpu.memory_space<vmem>>, %arg4: memref<8x1xf32, #tpu.memory_space<vmem>>, %arg5: memref<1x8x384xf32, #tpu.memory_space<vmem>>, %arg6: memref<72x384xbf16, #tpu.memory_space<vmem>>) attributes {dimension_semantics = [#tpu.dimension_semantics<parallel>, #tpu.dimension_semantics<parallel>], iteration_bounds = array<i64: 2, 1>, scalar_prefetch = 0 : i64, scratch_operands = 1 : i64, tpu.core_type = #tpu.core_type<tc>, window_params = [{transform_indices = @transform_0, window_bounds = array<i64: 1, 1, 8, 512>}, {pipeline_mode = #tpu.pipeline_mode<synchronous>, transform_indices = @transform_1, window_bounds = array<i64: 8, 72>}, {pipeline_mode = #tpu.pipeline_mode<synchronous>, transform_indices = @transform_2, window_bounds = array<i64: 8, 1>}, {transform_indices = @transform_3, window_bounds = array<i64: 1, 8, 384>}]} {
    %c0 = arith.constant 0 : index
    %c0_0 = arith.constant 0 : index
    %c0_1 = arith.constant 0 : index
    %c0_2 = arith.constant 0 : index
    %0 = vector.load %arg2[%c0, %c0_0, %c0_1, %c0_2] : memref<1x1x8x512xbf16, #tpu.memory_space<vmem>>, vector<1x1x8x384xbf16>
    %1 = vector.shape_cast %0 : vector<1x1x8x384xbf16> to vector<8x384xbf16>
    %c0_3 = arith.constant 0 : index
    %c0_4 = arith.constant 0 : index
    %2 = vector.load %arg6[%c0_3, %c0_4] : memref<72x384xbf16, #tpu.memory_space<vmem>>, vector<8x384xbf16>
    tpu.vector_store %arg6[%c0_3, %c0_4], %1 {strides = array<i32>} : memref<72x384xbf16, #tpu.memory_space<vmem>>, vector<8x384xbf16>,
    %c0_5 = arith.constant 0 : index
    %c0_6 = arith.constant 0 : index
    %c0_7 = arith.constant 0 : index
    %c1 = arith.constant 1 : index
    %3 = vector.load %arg2[%c0_5, %c0_6, %c0_7, %c1] : memref<1x1x8x512xbf16, #tpu.memory_space<vmem>>, vector<1x1x8x384xbf16>
    %4 = vector.shape_cast %3 : vector<1x1x8x384xbf16> to vector<8x384xbf16>
    %c8 = arith.constant 8 : index
    %c0_8 = arith.constant 0 : index
    %5 = vector.load %arg6[%c8, %c0_8] : memref<72x384xbf16, #tpu.memory_space<vmem>>, vector<8x384xbf16>
    tpu.vector_store %arg6[%c8, %c0_8], %4 {strides = array<i32>} : memref<72x384xbf16, #tpu.memory_space<vmem>>, vector<8x384xbf16>,
    %c0_9 = arith.constant 0 : index
    %c0_10 = arith.constant 0 : index
    %c0_11 = arith.constant 0 : index
    %c2 = arith.constant 2 : index
    %6 = vector.load %arg2[%c0_9, %c0_10, %c0_11, %c2] : memref<1x1x8x512xbf16, #tpu.memory_space<vmem>>, vector<1x1x8x384xbf16>
    %7 = vector.shape_cast %6 : vector<1x1x8x384xbf16> to vector<8x384xbf16>
    %c16 = arith.constant 16 : index
    %c0_12 = arith.constant 0 : index
    %8 = vector.load %arg6[%c16, %c0_12] : memref<72x384xbf16, #tpu.memory_space<vmem>>, vector<8x384xbf16>
    tpu.vector_store %arg6[%c16, %c0_12], %7 {strides = array<i32>} : memref<72x384xbf16, #tpu.memory_space<vmem>>, vector<8x384xbf16>,
    %c0_13 = arith.constant 0 : index
    %c0_14 = arith.constant 0 : index
    %c0_15 = arith.constant 0 : index
    %c18 = arith.constant 18 : index
    %9 = vector.load %arg2[%c0_13, %c0_14, %c0_15, %c18] : memref<1x1x8x512xbf16, #tpu.memory_space<vmem>>, vector<1x1x8x384xbf16>
    %10 = vector.shape_cast %9 : vector<1x1x8x384xbf16> to vector<8x384xbf16>
    %c24 = arith.constant 24 : index
    %c0_16 = arith.constant 0 : index
    %11 = vector.load %arg6[%c24, %c0_16] : memref<72x384xbf16, #tpu.memory_space<vmem>>, vector<8x384xbf16>
    tpu.vector_store %arg6[%c24, %c0_16], %10 {strides = array<i32>} : memref<72x384xbf16, #tpu.memory_space<vmem>>, vector<8x384xbf16>,
    %c0_17 = arith.constant 0 : index
    %c0_18 = arith.constant 0 : index
    %c0_19 = arith.constant 0 : index
    %c19 = arith.constant 19 : index
    %12 = vector.load %arg2[%c0_17, %c0_18, %c0_19, %c19] : memref<1x1x8x512xbf16, #tpu.memory_space<vmem>>, vector<1x1x8x384xbf16>
    %13 = vector.shape_cast %12 : vector<1x1x8x384xbf16> to vector<8x384xbf16>
    %c32 = arith.constant 32 : index
    %c0_20 = arith.constant 0 : index
    %14 = vector.load %arg6[%c32, %c0_20] : memref<72x384xbf16, #tpu.memory_space<vmem>>, vector<8x384xbf16>
    tpu.vector_store %arg6[%c32, %c0_20], %13 {strides = array<i32>} : memref<72x384xbf16, #tpu.memory_space<vmem>>, vector<8x384xbf16>,
    %c0_21 = arith.constant 0 : index
    %c0_22 = arith.constant 0 : index
    %c0_23 = arith.constant 0 : index
    %c20 = arith.constant 20 : index
    %15 = vector.load %arg2[%c0_21, %c0_22, %c0_23, %c20] : memref<1x1x8x512xbf16, #tpu.memory_space<vmem>>, vector<1x1x8x384xbf16>
    %16 = vector.shape_cast %15 : vector<1x1x8x384xbf16> to vector<8x384xbf16>
    %c40 = arith.constant 40 : index
    %c0_24 = arith.constant 0 : index
    %17 = vector.load %arg6[%c40, %c0_24] : memref<72x384xbf16, #tpu.memory_space<vmem>>, vector<8x384xbf16>
    tpu.vector_store %arg6[%c40, %c0_24], %16 {strides = array<i32>} : memref<72x384xbf16, #tpu.memory_space<vmem>>, vector<8x384xbf16>,
    %c0_25 = arith.constant 0 : index
    %c0_26 = arith.constant 0 : index
    %c0_27 = arith.constant 0 : index
    %c36 = arith.constant 36 : index
    %18 = vector.load %arg2[%c0_25, %c0_26, %c0_27, %c36] : memref<1x1x8x512xbf16, #tpu.memory_space<vmem>>, vector<1x1x8x384xbf16>
    %19 = vector.shape_cast %18 : vector<1x1x8x384xbf16> to vector<8x384xbf16>
    %c48 = arith.constant 48 : index
    %c0_28 = arith.constant 0 : index
    %20 = vector.load %arg6[%c48, %c0_28] : memref<72x384xbf16, #tpu.memory_space<vmem>>, vector<8x384xbf16>
    tpu.vector_store %arg6[%c48, %c0_28], %19 {strides = array<i32>} : memref<72x384xbf16, #tpu.memory_space<vmem>>, vector<8x384xbf16>,
    %c0_29 = arith.constant 0 : index
    %c0_30 = arith.constant 0 : index
    %c0_31 = arith.constant 0 : index
    %c37 = arith.constant 37 : index
    %21 = vector.load %arg2[%c0_29, %c0_30, %c0_31, %c37] : memref<1x1x8x512xbf16, #tpu.memory_space<vmem>>, vector<1x1x8x384xbf16>
    %22 = vector.shape_cast %21 : vector<1x1x8x384xbf16> to vector<8x384xbf16>
    %c56 = arith.constant 56 : index
    %c0_32 = arith.constant 0 : index
    %23 = vector.load %arg6[%c56, %c0_32] : memref<72x384xbf16, #tpu.memory_space<vmem>>, vector<8x384xbf16>
    tpu.vector_store %arg6[%c56, %c0_32], %22 {strides = array<i32>} : memref<72x384xbf16, #tpu.memory_space<vmem>>, vector<8x384xbf16>,
    %c0_33 = arith.constant 0 : index
    %c0_34 = arith.constant 0 : index
    %c0_35 = arith.constant 0 : index
    %c38 = arith.constant 38 : index
    %24 = vector.load %arg2[%c0_33, %c0_34, %c0_35, %c38] : memref<1x1x8x512xbf16, #tpu.memory_space<vmem>>, vector<1x1x8x384xbf16>
    %25 = vector.shape_cast %24 : vector<1x1x8x384xbf16> to vector<8x384xbf16>
    %c64 = arith.constant 64 : index
    %c0_36 = arith.constant 0 : index
    %26 = vector.load %arg6[%c64, %c0_36] : memref<72x384xbf16, #tpu.memory_space<vmem>>, vector<8x384xbf16>
    tpu.vector_store %arg6[%c64, %c0_36], %25 {strides = array<i32>} : memref<72x384xbf16, #tpu.memory_space<vmem>>, vector<8x384xbf16>,
    %c0_37 = arith.constant 0 : index
    %c0_38 = arith.constant 0 : index
    %27 = vector.load %arg3[%c0_37, %c0_38] : memref<8x72xbf16, #tpu.memory_space<vmem>>, vector<8x72xbf16>
    %c0_39 = arith.constant 0 : index
    %c0_40 = arith.constant 0 : index
    %28 = vector.load %arg6[%c0_39, %c0_40] : memref<72x384xbf16, #tpu.memory_space<vmem>>, vector<72x384xbf16>
    %cst = arith.constant dense<0.000000e+00> : vector<8x384xf32>
    %29 = tpu.matmul %27, %28, %cst {dimension_numbers = #tpu.dot_dimension_numbers<[1], [0], [0], [1], [0, 0, 1, 1], [], []>} : vector<8x72xbf16>, vector<72x384xbf16>, vector<8x384xf32> -> vector<8x384xf32>
    %c0_41 = arith.constant 0 : index
    %c0_42 = arith.constant 0 : index
    %30 = vector.load %arg4[%c0_41, %c0_42] : memref<8x1xf32, #tpu.memory_space<vmem>>, vector<8x1xf32>
    %31 = vector.broadcast %30 : vector<8x1xf32> to vector<8x384xf32>
    %32 = arith.addf %29, %31 : vector<8x384xf32>
    %c0_43 = arith.constant 0 : index
    %c0_44 = arith.constant 0 : index
    %c0_45 = arith.constant 0 : index
    %33 = vector.load %arg5[%c0_43, %c0_44, %c0_45] : memref<1x8x384xf32, #tpu.memory_space<vmem>>, vector<1x8x384xf32>
    %34 = vector.shape_cast %33 : vector<1x8x384xf32> to vector<8x384xf32>
    %35 = vector.shape_cast %32 : vector<8x384xf32> to vector<1x8x384xf32>
    tpu.vector_store %arg5[%c0_43, %c0_44, %c0_45], %35 {strides = array<i32>} : memref<1x8x384xf32, #tpu.memory_space<vmem>>, vector<1x8x384xf32>,
    return
  }
  func.func @transform_0(%arg0: i32, %arg1: i32) -> (i32, i32, i32, i32) {
    %c0_i32 = arith.constant 0 : i32
    %c0_i32_0 = arith.constant 0 : i32
    %c0_i32_1 = arith.constant 0 : i32
    return %arg0, %arg1, %c0_i32, %c0_i32_0 : i32, i32, i32, i32
  }
  func.func @transform_1(%arg0: i32, %arg1: i32) -> (i32, i32) {
    %c0_i32 = arith.constant 0 : i32
    %c0_i32_0 = arith.constant 0 : i32
    %c0_i32_1 = arith.constant 0 : i32
    return %c0_i32, %c0_i32_0 : i32, i32
  }
  func.func @transform_2(%arg0: i32, %arg1: i32) -> (i32, i32) {
    %c0_i32 = arith.constant 0 : i32
    %c0_i32_0 = arith.constant 0 : i32
    %c0_i32_1 = arith.constant 0 : i32
    return %c0_i32, %c0_i32_0 : i32, i32
  }
  func.func @transform_3(%arg0: i32, %arg1: i32) -> (i32, i32, i32) {
    %c0_i32 = arith.constant 0 : i32
    %c0_i32_0 = arith.constant 0 : i32
    return %arg0, %c0_i32, %arg1 : i32, i32, i32
  }
}

</mosaic_0001>

<llo_original>
// kernel: tpu_custom_call.1
$region0: #{tpu_custom_call.1}
  #allocation0 [shape = 'u32[]', space=smem, size = 0x4, offset = 0x4, fixed_abs, tag = 'smem constant byte address 0x4 - core index']
  #allocation1 [shape = 'u32[144,128]{1,0:T(1,128)}', space=vmem, size = 0x12000, scoped, tag = 'internal scratch']
  #allocation2 [shape = 'bf16[72,384]{1,0:T(8,128)(2,1)}', space=vmem, size = 0xd800, scoped, tag = 'scratch operand']
  %s0 = inlined_call_operand.hbm [shape: bf16[2,1,8,512], index: 0, kind: input, shape index: {}]
  %s1 = inlined_call_operand.vmem [shape: bf16[8,72], index: 1, kind: input, shape index: {}]
  %s2 = inlined_call_operand.vmem [shape: f32[8,1], index: 2, kind: input, shape index: {}]
  %s3 = inlined_call_operand.hbm [shape: f32[2,8,384], index: 3, kind: output, shape index: {}]
  %s4 = sld [smem:[#allocation0]]
  $region49: #{tpu_custom_call.1} parent=0
    _
  %s6 = ssub.s32 1, %s4
  %s7 = scalar_select 0, %s6, %s4
  $region1: #{tpu_custom_call.1} parent=0
    #allocation3 [shape = 'u8[16384]{0}', space=vmem, size = 0x4000, scoped, tag = 'input window, operand 0']
    #allocation4 [shape = 's32[2]{0}', space=sflag, size = 0x8, scoped, tag = 'scoped memory for tpu_custom_call.1']
    #allocation5 [shape = 's32[2]{0}', space=sflag, size = 0x8, scoped, tag = 'scoped memory for tpu_custom_call.1']
    #allocation6 [shape = 'u8[24576]{0}', space=vmem, size = 0x6000, scoped, tag = 'output window, operand 0']
    %8 = vsyncpa [#allocation4], 0
    %s9 = scalar_lea.sflag [#allocation4], 1
    %10 = vsyncpa %s9, 0
    %11 = vsyncpa [#allocation5], 0
    %s12 = scalar_lea.sflag [#allocation5], 1
    %13 = vsyncpa %s12, 0
    loop: start=0, step=1, limit=4
    $region2: #{tpu_custom_call.1} parent=1 // loop_pre_header
      _
    $region3: #{tpu_custom_call.1} parent=1 // loop_header
      %s15 = sphi 0, %s19
      %p16 = scmp.ge.s32.totalorder %s15, 4
      %s22 = sphi 0, %s34
      %s23 = sphi 0, %s30
      %s24 = sphi 0, %s22
      %s25 = sphi 0, %s23
      %s26 = sphi 0, %s24
      %s27 = sphi 0, %s25
      %s39 = sphi 0, %s41
      %s42 = sphi 0, %s39
      %s43 = sphi 0, %s42
      %s59 = sphi 0, %s43
      %s63 = sphi 0, %s63
      %s65 = sphi 0, %s63
      %s66 = sphi 0, %s65
      %s80 = sphi 0, %s66
      %s84 = sphi 0, %s84
      %s86 = sphi 0, %s84
      %s87 = sphi 0, %s86
      %s101 = sphi 0, %s87
      %s109 = sphi 0, %s111
      %s112 = sphi 0, %s109
      %s113 = sphi 0, %s112
      %s129 = sphi 0, %s113
    $region4: #{tpu_custom_call.1} parent=1 // loop_header_branch
      %18 = sbr.rel (%p16) target = $region8
    $region5: #{tpu_custom_call.1} parent=1 // loop_body
      %s20 = ssub.s32 %s15, 1
      %s21 = ssub.s32 %s15, 2
      %s28 = sadd.s32 1, %s23
      %p29 = scmp.ge.s32.totalorder %s28, 1
      %s30 = scalar_select %p29, 0, %s28
      %s31 = sadd.s32 1, %s22
      %s32 = scalar_select %p29, %s31, %s22
      %p33 = scmp.ge.s32.totalorder %s32, 2
      %s34 = scalar_select %p33, 0, %s32
      %s35 = ssub.s32 %s22, %s34
      %s36 = ssub.s32 %s23, %s30
      %s37 = sor.u32 %s35, %s36
      %p38 = scmp.eq.s32.totalorder %s37, 0
      %s40 = sadd.s32 %s39, 1
      %s41 = scalar_select %p38, %s39, %s40
      %p44 = pneg %p38
      %p45 = scmp.eq.s32.totalorder %s15, 1
      %p46 = por %p44, %p45
      %p47 = scmp.ne.s32.totalorder %s39, %s42
      %p48 = scmp.eq.s32.totalorder %s15, 0
      %p49 = por %p47, %p48
      %p50 = scmp.ne.s32.totalorder %s39, %s42
      %p51 = scmp.eq.s32.totalorder %s20, 1
      %p52 = por %p50, %p51
      %p53 = scmp.ne.s32.totalorder %s42, %s43
      %p54 = scmp.eq.s32.totalorder %s20, 0
      %p55 = por %p53, %p54
      %p56 = scmp.ne.s32.totalorder %s42, %s43
      %p57 = scmp.eq.s32.totalorder %s21, 1
      %p58 = por %p56, %p57
      %p60 = scmp.ne.s32.totalorder %s43, %s59
      %p61 = scmp.eq.s32.totalorder %s21, 0
      %p62 = por %p60, %p61
      %s64 = sadd.s32 %s63, 1
      %p67 = scmp.eq.s32.totalorder %s15, 1
      %p68 = scmp.ne.s32.totalorder %s63, %s65
      %p69 = scmp.eq.s32.totalorder %s15, 0
      %p70 = por %p68, %p69
      %p71 = scmp.ne.s32.totalorder %s63, %s65
      %p72 = scmp.eq.s32.totalorder %s20, 1
      %p73 = por %p71, %p72
      %p74 = scmp.ne.s32.totalorder %s65, %s66
      %p75 = scmp.eq.s32.totalorder %s20, 0
      %p76 = por %p74, %p75
      %p77 = scmp.ne.s32.totalorder %s65, %s66
      %p78 = scmp.eq.s32.totalorder %s21, 1
      %p79 = por %p77, %p78
      %p81 = scmp.ne.s32.totalorder %s66, %s80
      %p82 = scmp.eq.s32.totalorder %s21, 0
      %p83 = por %p81, %p82
      %s85 = sadd.s32 %s84, 1
      %p88 = scmp.eq.s32.totalorder %s15, 1
      %p89 = scmp.ne.s32.totalorder %s84, %s86
      %p90 = scmp.eq.s32.totalorder %s15, 0
      %p91 = por %p89, %p90
      %p92 = scmp.ne.s32.totalorder %s84, %s86
      %p93 = scmp.eq.s32.totalorder %s20, 1
      %p94 = por %p92, %p93
      %p95 = scmp.ne.s32.totalorder %s86, %s87
      %p96 = scmp.eq.s32.totalorder %s20, 0
      %p97 = por %p95, %p96
      %p98 = scmp.ne.s32.totalorder %s86, %s87
      %p99 = scmp.eq.s32.totalorder %s21, 1
      %p100 = por %p98, %p99
      %p102 = scmp.ne.s32.totalorder %s87, %s101
      %p103 = scmp.eq.s32.totalorder %s21, 0
      %p104 = por %p102, %p103
      %s105 = ssub.s32 %s22, %s34
      %s106 = ssub.s32 %s23, %s30
      %s107 = sor.u32 %s105, %s106
      %p108 = scmp.eq.s32.totalorder %s107, 0
      %s110 = sadd.s32 %s109, 1
      %s111 = scalar_select %p108, %s109, %s110
      %p114 = pneg %p108
      %p115 = scmp.eq.s32.totalorder %s15, 1
      %p116 = por %p114, %p115
      %p117 = scmp.ne.s32.totalorder %s109, %s112
      %p118 = scmp.eq.s32.totalorder %s15, 0
      %p119 = por %p117, %p118
      %p120 = scmp.ne.s32.totalorder %s109, %s112
      %p121 = scmp.eq.s32.totalorder %s20, 1
      %p122 = por %p120, %p121
      %p123 = scmp.ne.s32.totalorder %s112, %s113
      %p124 = scmp.eq.s32.totalorder %s20, 0
      %p125 = por %p123, %p124
      %p126 = scmp.ne.s32.totalorder %s112, %s113
      %p127 = scmp.eq.s32.totalorder %s21, 1
      %p128 = por %p126, %p127
      %p130 = scmp.ne.s32.totalorder %s113, %s129
      %p131 = scmp.eq.s32.totalorder %s21, 0
      %p132 = por %p130, %p131
      %p133 = scmp.le.s32.totalorder 1, %s15
      %p134 = scmp.lt.s32.totalorder %s15, 3
      %p135 = pnand %p133, %p134
      %p136 = pneg %p135
      // Predicated region
      $region9: #{tpu_custom_call.1} parent=5 // pred_check
        _
      $region10: #{tpu_custom_call.1} parent=5 // pred_check_branch
        %138 = sbr.rel (%p135) target = $region12
      $region11: #{tpu_custom_call.1} parent=5 // pred_region
        %s139 = ssub.s32 %s15, 1
        // Predicated region
        $region13: #{tpu_custom_call.1} parent=11 // pred_check
          %p140 = pneg %p76
        $region14: #{tpu_custom_call.1} parent=11 // pred_check_branch
          %142 = sbr.rel (%p140) target = $region16
        $region15: #{tpu_custom_call.1} parent=11 // pred_region
          _
        $region16: #{tpu_custom_call.1} parent=11 // pred_fallthru
          _
        // Predicated region
        $region17: #{tpu_custom_call.1} parent=11 // pred_check
          %p143 = pneg %p97
        $region18: #{tpu_custom_call.1} parent=11 // pred_check_branch
          %145 = sbr.rel (%p143) target = $region20
        $region19: #{tpu_custom_call.1} parent=11 // pred_region
          _
        $region20: #{tpu_custom_call.1} parent=11 // pred_fallthru
          _
      $region12: #{tpu_custom_call.1} parent=5 // pred_fallthru
        _
      %p146 = scmp.lt.s32.totalorder %s15, 2
      // Predicated region
      $region21: #{tpu_custom_call.1} parent=5 // pred_check
        %p147 = pneg %p146
      $region22: #{tpu_custom_call.1} parent=5 // pred_check_branch
        %149 = sbr.rel (%p147) target = $region24
      $region23: #{tpu_custom_call.1} parent=5 // pred_region
        // Predicated region
        $region25: #{tpu_custom_call.1} parent=23 // pred_check
          %p150 = pneg %p49
        $region26: #{tpu_custom_call.1} parent=23 // pred_check_branch
          %152 = sbr.rel (%p150) target = $region28
        $region27: #{tpu_custom_call.1} parent=23 // pred_region
          %s153 = sand.u32 %s39, 1
          %s154 = scalar_lea.sflag [#allocation4], %s153
          %s155 = sand.u32 %s39, 1
          %s156 = smul.addr %s155, 16
          %s157 = scalar_lea.vmem [#allocation3], %s156
          %s159 = ssub.s32 256, 256
          %160 = vsyncadd %s154, %s159
          %s161 = smul.addr %s23, 4
          %s162 = smul.addr %s22, 4
          %s163 = sadd.s32 %s161, %s162
          %s164 = smul.addr %s163, 64
          %s165 = scalar_lea.hbm %s0, %s164
          %s167 = sshll.u32 %s157, 4
          %s168 = int_to_ptr.vmem [resolvable:$true] %s167
          %170 = dma.hbm_to_vmem [thread:$0]  %s165, 256, %s168, %s154
        $region28: #{tpu_custom_call.1} parent=23 // pred_fallthru
          _
      $region24: #{tpu_custom_call.1} parent=5 // pred_fallthru
        _
      %p171 = scmp.le.s32.totalorder 1, %s15
      %p172 = scmp.lt.s32.totalorder %s15, 3
      %p173 = pnand %p171, %p172
      %p174 = pneg %p173
      // Predicated region
      $region29: #{tpu_custom_call.1} parent=5 // pred_check
        _
      $region30: #{tpu_custom_call.1} parent=5 // pred_check_branch
        %176 = sbr.rel (%p173) target = $region32
      $region31: #{tpu_custom_call.1} parent=5 // pred_region
        %s177 = ssub.s32 %s15, 1
        %s178 = sand.u32 %s42, 1
        %s179 = scalar_lea.sflag [#allocation4], %s178
        %s180 = sand.u32 %s42, 1
        %s181 = smul.addr %s180, 16
        %s182 = scalar_lea.vmem [#allocation3], %s181
        // Predicated region
        $region33: #{tpu_custom_call.1} parent=31 // pred_check
          %p183 = pneg %p55
        $region34: #{tpu_custom_call.1} parent=31 // pred_check_branch
          %185 = sbr.rel (%p183) target = $region36
        $region35: #{tpu_custom_call.1} parent=31 // pred_region
          %186 = dma.done %s179, 256
        $region36: #{tpu_custom_call.1} parent=31 // pred_fallthru
          _
        %s187 = sand.u32 %s42, 1
        %s188 = scalar_lea.sflag [#allocation4], %s187
        %s189 = sand.u32 %s42, 1
        %s190 = smul.addr %s189, 16
        %s191 = scalar_lea.vmem [#allocation3], %s190
        %p192 = pneg %p55
        %p193 = pneg %p52
        %p194 = pneg %p76
        %p195 = pneg %p73
        %p196 = pneg %p97
        %p197 = pneg %p94
        %p198 = pneg %p125
        %p199 = pneg %p122
        %s200 = sand.u32 %s112, 1
        %s201 = scalar_lea.sflag [#allocation5], %s200
        %s202 = sand.u32 %s112, 1
        %s203 = smul.addr %s202, 24
        %s204 = scalar_lea.vmem [#allocation6], %s203
        %s205 = smul.u32 3, %s25
        %v207 = vld [vmem:[%s182] sm:$0xff]
        %v208 = vld [vmem:[%s182 + $0x8] sm:$0xf]
        %209 = vst [vmem:[#allocation2] sm:$0xff] %v207
        %210 = vst [vmem:[#allocation2 + $0x8] sm:$0xf] %v208
        %v211 = vld [vmem:[%s182] sm:$0xff]
        %v212 = vld [vmem:[%s182 + $0x8] sm:$0xff]
        %215 = vrot.lane.b32.xlu0 %v211, 127
        %v216 = vpop.permute.xlu0 %215
        %217 = vrot.lane.b32.xlu0 %v212, 127
        %v218 = vpop.permute.xlu0 %217
        %v219 = vrot.slane %v216, 4
        %v220 = vrot.slane %v218, 4
        %vm221 = vcmask 1043456
        %v222 = vsel %vm221, %v219, %v220
        %vm223 = vcmask 1039360
        %v224 = vsel %vm223, %v216, %v222
        %v225 = vsel %vm223, %v218, %v220
        %228 = vst [vmem:[#allocation2 + $0xc] sm:$0xff] %v224
        %229 = vst [vmem:[#allocation2 + $0x14] sm:$0xf] %v225
        %v230 = vld [vmem:[%s182] sm:$0xff]
        %v231 = vld [vmem:[%s182 + $0x8] sm:$0xff]
        %234 = vrot.lane.b32.xlu0 %v230, 126
        %v235 = vpop.permute.xlu0 %234
        %236 = vrot.lane.b32.xlu0 %v231, 126
        %v237 = vpop.permute.xlu0 %236
        %v238 = vrot.slane %v235, 4
        %v239 = vrot.slane %v237, 4
        %v240 = vsel %vm221, %v238, %v239
        %vm241 = vcmask 1031168
        %v242 = vsel %vm241, %v235, %v240
        %v243 = vsel %vm241, %v237, %v239
        %246 = vst [vmem:[#allocation2 + $0x18] sm:$0xff] %v242
        %247 = vst [vmem:[#allocation2 + $0x20] sm:$0xf] %v243
        %v248 = vld [vmem:[%s182] sm:$0xff]
        %v249 = vld [vmem:[%s182 + $0x8] sm:$0xff]
        %252 = vrot.lane.b32.xlu0 %v248, 110
        %v253 = vpop.permute.xlu0 %252
        %254 = vrot.lane.b32.xlu0 %v249, 110
        %v255 = vpop.permute.xlu0 %254
        %v256 = vrot.slane %v253, 4
        %v257 = vrot.slane %v255, 4
        %v258 = vsel %vm221, %v256, %v257
        %vm259 = vcmask 900096
        %v260 = vsel %vm259, %v253, %v258
        %v261 = vsel %vm259, %v255, %v257
        %264 = vst [vmem:[#allocation2 + $0x24] sm:$0xff] %v260
        %265 = vst [vmem:[#allocation2 + $0x2c] sm:$0xf] %v261
        %v266 = vld [vmem:[%s182] sm:$0xff]
        %v267 = vld [vmem:[%s182 + $0x8] sm:$0xff]
        %270 = vrot.lane.b32.xlu0 %v266, 109
        %v271 = vpop.permute.xlu0 %270
        %272 = vrot.lane.b32.xlu0 %v267, 109
        %v273 = vpop.permute.xlu0 %272
        %v274 = vrot.slane %v271, 4
        %v275 = vrot.slane %v273, 4
        %v276 = vsel %vm221, %v274, %v275
        %vm277 = vcmask 891904
        %v278 = vsel %vm277, %v271, %v276
        %v279 = vsel %vm277, %v273, %v275
        %282 = vst [vmem:[#allocation2 + $0x30] sm:$0xff] %v278
        %283 = vst [vmem:[#allocation2 + $0x38] sm:$0xf] %v279
        %v284 = vld [vmem:[%s182] sm:$0xff]
        %v285 = vld [vmem:[%s182 + $0x8] sm:$0xff]
        %288 = vrot.lane.b32.xlu0 %v284, 108
        %v289 = vpop.permute.xlu0 %288
        %290 = vrot.lane.b32.xlu0 %v285, 108
        %v291 = vpop.permute.xlu0 %290
        %v292 = vrot.slane %v289, 4
        %v293 = vrot.slane %v291, 4
        %v294 = vsel %vm221, %v292, %v293
        %vm295 = vcmask 883712
        %v296 = vsel %vm295, %v289, %v294
        %v297 = vsel %vm295, %v291, %v293
        %300 = vst [vmem:[#allocation2 + $0x3c] sm:$0xff] %v296
        %301 = vst [vmem:[#allocation2 + $0x44] sm:$0xf] %v297
        %v302 = vld [vmem:[%s182] sm:$0xff]
        %v303 = vld [vmem:[%s182 + $0x8] sm:$0xff]
        %306 = vrot.lane.b32.xlu0 %v302, 92
        %v307 = vpop.permute.xlu0 %306
        %308 = vrot.lane.b32.xlu0 %v303, 92
        %v309 = vpop.permute.xlu0 %308
        %v310 = vrot.slane %v307, 4
        %v311 = vrot.slane %v309, 4
        %v312 = vsel %vm221, %v310, %v311
        %vm313 = vcmask 752640
        %v314 = vsel %vm313, %v307, %v312
        %v315 = vsel %vm313, %v309, %v311
        %318 = vst [vmem:[#allocation2 + $0x48] sm:$0xff] %v314
        %319 = vst [vmem:[#allocation2 + $0x50] sm:$0xf] %v315
        %v320 = vld [vmem:[%s182] sm:$0xff]
        %v321 = vld [vmem:[%s182 + $0x8] sm:$0xff]
        %324 = vrot.lane.b32.xlu0 %v320, 91
        %v325 = vpop.permute.xlu0 %324
        %326 = vrot.lane.b32.xlu0 %v321, 91
        %v327 = vpop.permute.xlu0 %326
        %v328 = vrot.slane %v325, 4
        %v329 = vrot.slane %v327, 4
        %v330 = vsel %vm221, %v328, %v329
        %vm331 = vcmask 744448
        %v332 = vsel %vm331, %v325, %v330
        %v333 = vsel %vm331, %v327, %v329
        %336 = vst [vmem:[#allocation2 + $0x54] sm:$0xff] %v332
        %337 = vst [vmem:[#allocation2 + $0x5c] sm:$0xf] %v333
        %v338 = vld [vmem:[%s182] sm:$0xff]
        %v339 = vld [vmem:[%s182 + $0x8] sm:$0xff]
        %342 = vrot.lane.b32.xlu0 %v338, 90
        %v343 = vpop.permute.xlu0 %342
        %344 = vrot.lane.b32.xlu0 %v339, 90
        %v345 = vpop.permute.xlu0 %344
        %v346 = vrot.slane %v343, 4
        %v347 = vrot.slane %v345, 4
        %v348 = vsel %vm221, %v346, %v347
        %vm349 = vcmask 736256
        %v350 = vsel %vm349, %v343, %v348
        %v351 = vsel %vm349, %v345, %v347
        %354 = vst [vmem:[#allocation2 + $0x60] sm:$0xff] %v350
        %355 = vst [vmem:[#allocation2 + $0x68] sm:$0xf] %v351
        %v356 = vld [vmem:[%s1] sm:$0xf]
        %v357 = vld [vmem:[#allocation2] sm:$0xff]
        %v358 = vld [vmem:[#allocation2 + $0x8] sm:$0xf]
        %v359 = vld [vmem:[#allocation2 + $0xc] sm:$0xff]
        %v360 = vld [vmem:[#allocation2 + $0x14] sm:$0xf]
        %v361 = vld [vmem:[#allocation2 + $0x18] sm:$0xff]
        %v362 = vld [vmem:[#allocation2 + $0x20] sm:$0xf]
        %v363 = vld [vmem:[#allocation2 + $0x24] sm:$0xff]
        %v364 = vld [vmem:[#allocation2 + $0x2c] sm:$0xf]
        %v365 = vld [vmem:[#allocation2 + $0x30] sm:$0xff]
        %v366 = vld [vmem:[#allocation2 + $0x38] sm:$0xf]
        %v367 = vld [vmem:[#allocation2 + $0x3c] sm:$0xff]
        %v368 = vld [vmem:[#allocation2 + $0x44] sm:$0xf]
        %v369 = vld [vmem:[#allocation2 + $0x48] sm:$0xff]
        %v370 = vld [vmem:[#allocation2 + $0x50] sm:$0xf]
        %v371 = vld [vmem:[#allocation2 + $0x54] sm:$0xff]
        %v372 = vld [vmem:[#allocation2 + $0x5c] sm:$0xf]
        %v373 = vld [vmem:[#allocation2 + $0x60] sm:$0xff]
        %v374 = vld [vmem:[#allocation2 + $0x68] sm:$0xf]
        %v375 = vld [vmem:[%s2] sm:$0xff]
        %377 = vset.pattern.permute.xlu0 0
        %378 = vperm.xlu0 %377, %v375
        %v379 = vpop.permute.xlu0 %378
        %v399 = vunpack.c.l.b16 %v357
        %v400 = vunpack.c.h.b16 %v357
        %v401 = vunpack.c.l.b16 %v358
        %v402 = vunpack.c.l.b16 %v359
        %v403 = vunpack.c.h.b16 %v359
        %v404 = vunpack.c.l.b16 %v360
        %v405 = vunpack.c.l.b16 %v361
        %v406 = vunpack.c.h.b16 %v361
        %v407 = vunpack.c.l.b16 %v362
        %v408 = vunpack.c.l.b16 %v363
        %v409 = vunpack.c.h.b16 %v363
        %v410 = vunpack.c.l.b16 %v364
        %v411 = vunpack.c.l.b16 %v365
        %v412 = vunpack.c.h.b16 %v365
        %v413 = vunpack.c.l.b16 %v366
        %v414 = vunpack.c.l.b16 %v367
        %v415 = vunpack.c.h.b16 %v367
        %v416 = vunpack.c.l.b16 %v368
        %v417 = vunpack.c.l.b16 %v369
        %v418 = vunpack.c.h.b16 %v369
        %v419 = vunpack.c.l.b16 %v370
        %v420 = vunpack.c.l.b16 %v371
        %v421 = vunpack.c.h.b16 %v371
        %v422 = vunpack.c.l.b16 %v372
        %v423 = vunpack.c.l.b16 %v373
        %v424 = vunpack.c.h.b16 %v373
        %v425 = vunpack.c.l.b16 %v374
        %v426 = vpack.c.b16 %v402, %v399
        %v427 = vpack.c.b16 %v403, %v400
        %v428 = vpack.c.b16 %v404, %v401
        %v429 = vpack.c.b16 %v408, %v405
        %v430 = vpack.c.b16 %v409, %v406
        %v431 = vpack.c.b16 %v410, %v407
        %v432 = vpack.c.b16 %v414, %v411
        %v433 = vpack.c.b16 %v415, %v412
        %v434 = vpack.c.b16 %v416, %v413
        %v435 = vpack.c.b16 %v420, %v417
        %v436 = vpack.c.b16 %v421, %v418
        %v437 = vpack.c.b16 %v422, %v419
        %v438 = vpack.c.b16 %v423, %v423
        %v439 = vpack.c.b16 %v424, %v424
        %v440 = vpack.c.b16 %v425, %v425
        %vm453 = vcmask 588800
        %v455 = vsel %vm453, %v356, 0
        %vm457 = vcmask 1043456
        %v459 = vsel %vm457, %v438, 0
        %v462 = vsel %vm457, %v439, 0
        %v465 = vsel %vm457, %v440, 0
        %467 = vmatprep.subr.bf16.mxu0 %v427
        %468 = vmatpush1.bf16.msra.mxu0 %v426
        %469 = vmatprep.subr.bf16.mxu0 %v430
        %470 = vmatpush1.bf16.msra.mxu0 %v429
        %471 = vmatprep.subr.bf16.mxu0 %v433
        %472 = vmatpush1.bf16.msra.mxu0 %v432
        %473 = vmatprep.subr.bf16.mxu0 %v436
        %474 = vmatpush1.bf16.msra.mxu0 %v435
        %475 = vmatprep.subr.bf16.mxu0 %v462
        %476 = vmatpush1.bf16.msra.mxu0 %v459
        %477 = vmatprep.subr.bf16.mxu0 0
        %478 = vmatpush1.bf16.msra.mxu0 0
        %479 = vmatprep.subr.bf16.mxu0 0
        %480 = vmatpush1.bf16.msra.mxu0 0
        %481 = vmatprep.subr.bf16.mxu0 0
        %482 = vmatpush1.bf16.msra.mxu0 0
        %483 = vmatprep.subr.bf16.mxu0 0
        %484 = vmatpush1.bf16.msra.mxu0 0
        %485 = vmatprep.subr.bf16.mxu0 0
        %486 = vmatpush1.bf16.msra.mxu0 0
        %487 = vmatprep.subr.bf16.mxu0 0
        %488 = vmatpush1.bf16.msra.mxu0 0
        %489 = vmatprep.subr.bf16.mxu0 0
        %490 = vmatpush1.bf16.msra.mxu0 0
        %491 = vmatprep.subr.bf16.mxu0 0
        %492 = vmatpush1.bf16.msra.mxu0 0
        %493 = vmatprep.subr.bf16.mxu0 0
        %494 = vmatpush1.bf16.msra.mxu0 0
        %495 = vmatprep.subr.bf16.mxu0 0
        %496 = vmatpush1.bf16.msra.mxu0 0
        %497 = vmatprep.subr.bf16.mxu0 0
        %498 = vmatpush1.bf16.msra.mxu0 0
        %499 = vmatprep.mubr.bf16.mxu0 0
        %500 = vmatmul.mubr.bf16.gmra.mrb[0].mxu0 %v455
        %v501 = vpop.f32.mrb[0].mxu0
        %v502 = vadd.f32 %v379, %v501
        %v503 = vpop.f32.mrb[0].mxu0
        %v504 = vadd.f32 %v379, %v503
        %v505 = vpop.f32.mrb[0].mxu0
        %v506 = vpop.f32.mrb[0].mxu0
        %507 = vdwg.mxu0
        %508 = vmatprep.subr.bf16.mxu0 0
        %509 = vmatpush1.bf16.msra.mxu0 %v428
        %510 = vmatprep.subr.bf16.mxu0 0
        %511 = vmatpush1.bf16.msra.mxu0 %v431
        %512 = vmatprep.subr.bf16.mxu0 0
        %513 = vmatpush1.bf16.msra.mxu0 %v434
        %514 = vmatprep.subr.bf16.mxu0 0
        %515 = vmatpush1.bf16.msra.mxu0 %v437
        %516 = vmatprep.subr.bf16.mxu0 0
        %517 = vmatpush1.bf16.msra.mxu0 %v465
        %518 = vmatprep.subr.bf16.mxu0 0
        %519 = vmatpush1.bf16.msra.mxu0 0
        %520 = vmatprep.subr.bf16.mxu0 0
        %521 = vmatpush1.bf16.msra.mxu0 0
        %522 = vmatprep.subr.bf16.mxu0 0
        %523 = vmatpush1.bf16.msra.mxu0 0
        %524 = vmatprep.subr.bf16.mxu0 0
        %525 = vmatpush1.bf16.msra.mxu0 0
        %526 = vmatprep.subr.bf16.mxu0 0
        %527 = vmatpush1.bf16.msra.mxu0 0
        %528 = vmatprep.subr.bf16.mxu0 0
        %529 = vmatpush1.bf16.msra.mxu0 0
        %530 = vmatprep.subr.bf16.mxu0 0
        %531 = vmatpush1.bf16.msra.mxu0 0
        %532 = vmatprep.subr.bf16.mxu0 0
        %533 = vmatpush1.bf16.msra.mxu0 0
        %534 = vmatprep.subr.bf16.mxu0 0
        %535 = vmatpush1.bf16.msra.mxu0 0
        %536 = vmatprep.subr.bf16.mxu0 0
        %537 = vmatpush1.bf16.msra.mxu0 0
        %538 = vmatprep.subr.bf16.mxu0 0
        %539 = vmatpush1.bf16.msra.mxu0 0
        %540 = vmatprep.mubr.bf16.mxu0 0
        %541 = vmatmul.mubr.bf16.gmra.mrb[0].mxu0 %v455
        %v542 = vpop.f32.mrb[0].mxu0
        %v543 = vadd.f32 %v379, %v542
        %v544 = vpop.f32.mrb[0].mxu0
        %v545 = vpop.f32.mrb[0].mxu0
        %v546 = vpop.f32.mrb[0].mxu0
        %547 = vdwg.mxu0
        %548 = vst [vmem:[%s204] sm:$0xff] %v502
        %549 = vst [vmem:[%s204 + $0x8] sm:$0xff] %v504
        %550 = vst [vmem:[%s204 + $0x10] sm:$0xff] %v543
        %s551 = sand.u32 %s112, 1
        %s552 = scalar_lea.sflag [#allocation5], %s551
        %s553 = sand.u32 %s112, 1
        %s554 = smul.addr %s553, 24
        %s555 = scalar_lea.vmem [#allocation6], %s554
        // Predicated region
        $region37: #{tpu_custom_call.1} parent=31 // pred_check
          %p556 = pneg %p122
        $region38: #{tpu_custom_call.1} parent=31 // pred_check_branch
          %558 = sbr.rel (%p556) target = $region40
        $region39: #{tpu_custom_call.1} parent=31 // pred_region
          %s559 = smul.u32 3, %s25
          %s561 = ssub.s32 384, 384
          %562 = vsyncadd %s552, %s561
          %s563 = smul.addr %s24, 3
          %s564 = sadd.s32 %s559, %s563
          %s565 = smul.addr %s564, 128
          %s566 = scalar_lea.hbm %s3, %s565
          %s568 = sshll.u32 %s555, 4
          %s569 = int_to_ptr.vmem [resolvable:$true] %s568
          %571 = dma.vmem_to_hbm [thread:$0]  %s569, 384, %s566, %s552
        $region40: #{tpu_custom_call.1} parent=31 // pred_fallthru
          _
      $region32: #{tpu_custom_call.1} parent=5 // pred_fallthru
        _
      %p572 = scmp.le.s32.totalorder 2, %s15
      // Predicated region
      $region41: #{tpu_custom_call.1} parent=5 // pred_check
        %p573 = pneg %p572
      $region42: #{tpu_custom_call.1} parent=5 // pred_check_branch
        %575 = sbr.rel (%p573) target = $region44
      $region43: #{tpu_custom_call.1} parent=5 // pred_region
        %s576 = ssub.s32 %s15, 2
        // Predicated region
        $region45: #{tpu_custom_call.1} parent=43 // pred_check
          %p577 = pneg %p128
        $region46: #{tpu_custom_call.1} parent=43 // pred_check_branch
          %579 = sbr.rel (%p577) target = $region48
        $region47: #{tpu_custom_call.1} parent=43 // pred_region
          %s580 = sand.u32 %s113, 1
          %s581 = scalar_lea.sflag [#allocation5], %s580
          %s582 = sand.u32 %s113, 1
          %s583 = smul.addr %s582, 24
          %s584 = scalar_lea.vmem [#allocation6], %s583
          %585 = dma.done %s581, 384
        $region48: #{tpu_custom_call.1} parent=43 // pred_fallthru
          _
      $region44: #{tpu_custom_call.1} parent=5 // pred_fallthru
        _
    $region6: #{tpu_custom_call.1} parent=1 // loop_footer
      %s19 = sadd.s32 1, %s15
    $region7: #{tpu_custom_call.1} parent=1 // loop_footer_branch
      %14 = sbr.rel target = $region3
    $region8: #{tpu_custom_call.1} parent=1 // loop_exit
      _
    %586 = vsyncpa [#allocation4], 1
    %s587 = scalar_lea.sflag [#allocation4], 1
    %588 = vsyncpa %s587, 1
    %589 = vsyncpa [#allocation5], 1
    %s590 = scalar_lea.sflag [#allocation5], 1
    %591 = vsyncpa %s590, 1

</llo_original>
